<compile_context>
chip_gen: v5e
topology: v5e:2x2
jax: 0.10.0
libtpu: 0.0.40
codegen_flags: <defaults>
</compile_context>

<pallas_src>
import functools
import math

import jax
import jax.numpy as jnp
from jax import lax
from jax.experimental import pallas as pl
from jax.experimental.pallas import tpu as pltpu


def _softplus(x):
    # Matches torch.nn.Softplus(beta=1, threshold=20): linear above threshold.
    safe = jnp.minimum(x, 20.0)
    return jnp.where(x > 20.0, x, jnp.log1p(jnp.exp(safe)))


def inf_layer_kernel(
    h_ref, w_ref, noise_ref,
    wqkv_ref, bqkv_ref, wo_ref, bo_ref, w12t_ref, w12b_ref, b12_ref,
    out_ref,
    *, num_heads, B, S, d_model, d_proj, d_latent,
):
    dh = d_model // num_heads
    scale = 1.0 / math.sqrt(dh)
    Dp = d_proj                       # per-projection lane width (padded to 128)
    Dl = d_latent

    h = h_ref[...]                                           # [B*S, D]

    # --- fused, lane-group-aligned QKV projection ------------------------
    # wqkv is [D, 3*Dp] with each projection zero-padded to a full 128-lane
    # group, so the q/k/v slices below start on vreg boundaries (no rotates).
    qkv = jnp.dot(h, wqkv_ref[...],
                  preferred_element_type=jnp.float32) + bqkv_ref[...]
    q = qkv[:, 0 * Dp:1 * Dp].reshape(B, S, Dp)
    k = qkv[:, 1 * Dp:2 * Dp].reshape(B, S, Dp)
    v = qkv[:, 2 * Dp:3 * Dp].reshape(B, S, Dp)

    # --- multi-head self-attention, batched over B, heads via lane masks --
    lane = lax.broadcasted_iota(jnp.int32, (B, S, Dp), 2)
    attn = None
    for hd in range(num_heads):                              # static, short loop
        lo = hd * dh
        m = (lane >= lo) & (lane < lo + dh)
        q_h = jnp.where(m, q, 0.0)                           # VPU select, no XLU
        s = jnp.einsum('bqd,bkd->bqk', q_h, k,
                       preferred_element_type=jnp.float32) * scale
        s = s - jnp.max(s, axis=-1, keepdims=True)
        p = jnp.exp(s)
        p = p / jnp.sum(p, axis=-1, keepdims=True)           # exact normalization
        v_h = jnp.where(m, v, 0.0)
        o_h = jnp.einsum('bqk,bkd->bqd', p, v_h,
                         preferred_element_type=jnp.float32)
        attn = o_h if attn is None else attn + o_h           # VPU add, no concat

    attn2 = attn.reshape(B * S, Dp)                          # lanes >= D are zero
    k_out = jnp.dot(attn2, wo_ref[...],
                    preferred_element_type=jnp.float32) + bo_ref[...]   # [B*S, D]

    # --- latent head without the hw lane-concat ---------------------------
    # mp = concat([w_hat, k_out]) @ [W1|W2] + [b1|b2], realized as two matmuls.
    mp = (jnp.dot(w_ref[...], w12t_ref[...], preferred_element_type=jnp.float32)
          + jnp.dot(k_out, w12b_ref[...], preferred_element_type=jnp.float32)
          + b12_ref[...])                                    # [B*S, 2*Dl] = [mean|std_pre]

    lane2 = lax.broadcasted_iota(jnp.int32, (B * S, 2 * Dl), 1)
    ms = jnp.where(lane2 >= Dl, _softplus(mp), mp)           # [mean | std]

    # one unmasked full-128-lane store for [mean | std]
    out_ref[:, :2 * Dl] = ms.astype(out_ref.dtype)

    mean = mp[:, :Dl]
    std = ms[:, Dl:]
    z = mean + noise_ref[...] * std
    # vreg-aligned 64-lane tail store for z
    out_ref[:, 2 * Dl:] = z.astype(out_ref.dtype)


def prepare_params(params, d_model, d_w):
    """One-time weight fusion / lane padding (hoisted out of the forward path)."""
    Dp = pl.cdiv(d_model, 128) * 128        # pad each projection to full lane groups
    f32 = jnp.float32

    def pad_cols(w, b):
        wp = jnp.zeros((d_model, Dp), f32).at[:, :d_model].set(w.astype(f32))
        bp = jnp.zeros((1, Dp), f32).at[:, :d_model].set(b.astype(f32))
        return wp, bp

    wq, bq = pad_cols(params["wq"], params["bq"])
    wk, bk = pad_cols(params["wk"], params["bk"])
    wv, bv = pad_cols(params["wv"], params["bv"])
    wqkv = jnp.concatenate([wq, wk, wv], axis=1)                       # [D, 3*Dp]
    bqkv = jnp.concatenate([bq, bk, bv], axis=1)                       # [1, 3*Dp]
    wo = jnp.zeros((Dp, d_model), f32).at[:d_model, :].set(params["wo"].astype(f32))

    # dense1|dense2 fused column-wise, then split row-wise (w_hat rows / k rows)
    w12_top = jnp.concatenate([params["w1"][:d_w], params["w2"][:d_w]], axis=1)   # [Dw, 2Dl]
    w12_bot = jnp.concatenate([params["w1"][d_w:], params["w2"][d_w:]], axis=1)   # [D, 2Dl]
    b12 = jnp.concatenate([params["b1"], params["b2"]], axis=1)                   # [1, 2Dl]

    return {"wqkv": wqkv, "bqkv": bqkv, "wo": wo, "bo": params["bo"].astype(f32),
            "w12_top": w12_top, "w12_bot": w12_bot, "b12": b12, "d_proj": Dp}


def inf_layer(h_T, w_hat, noise, prep, *, num_heads):
    B, S, D = h_T.shape
    Dw = w_hat.shape[-1]
    Dl = Dw + D
    Dp = prep["d_proj"]
    assert noise.shape == (B, S, Dl)

    # Flatten batch into rows: one kernel invocation, denser sublane fill.
    h2 = h_T.reshape(B * S, D)
    w2 = w_hat.reshape(B * S, Dw)
    n2 = noise.reshape(B * S, Dl)

    full = lambda shp: pl.BlockSpec(shp, lambda i, _s=len(shp): (0,) * _s)

    kernel = functools.partial(
        inf_layer_kernel, num_heads=num_heads, B=B, S=S,
        d_model=D, d_proj=Dp, d_latent=Dl)

    out = pl.pallas_call(
        kernel,
        grid=(1,),
        in_specs=[
            full((B * S, D)),          # h
            full((B * S, Dw)),         # w_hat
            full((B * S, Dl)),         # noise
            full((D, 3 * Dp)),         # fused, padded Wqkv
            full((1, 3 * Dp)),         # fused, padded bqkv
            full((Dp, D)),             # padded Wo
            full((1, D)),              # bo
            full((Dw, 2 * Dl)),        # W1|W2 rows for w_hat
            full((D, 2 * Dl)),         # W1|W2 rows for k
            full((1, 2 * Dl)),         # b1|b2
        ],
        out_specs=full((B * S, 3 * Dl)),
        out_shape=jax.ShapeDtypeStruct((B * S, 3 * Dl), jnp.float32),
        compiler_params=pltpu.CompilerParams(dimension_semantics=("arbitrary",)),
    )(h2, w2, n2, prep["wqkv"], prep["bqkv"], prep["wo"], prep["bo"],
      prep["w12_top"], prep["w12_bot"], prep["b12"])

    out = out.reshape(B, S, 3 * Dl)                  # [mean | std | z]
    mean = out[..., :Dl]
    std = out[..., Dl:2 * Dl]
    z = out[..., 2 * Dl:]
    return z, mean, std


def inf_layer_ref(h_T, w_hat, noise, params, *, num_heads):
    """Pure-JAX reference of the same forward pass."""
    B, S, D = h_T.shape
    dh = D // num_heads
    h2 = h_T.reshape(B * S, D)
    with jax.default_matmul_precision("float32"):
        q = (h2 @ params["wq"] + params["bq"]).reshape(B, S, num_heads, dh)
        k = (h2 @ params["wk"] + params["bk"]).reshape(B, S, num_heads, dh)
        v = (h2 @ params["wv"] + params["bv"]).reshape(B, S, num_heads, dh)
        q, k, v = (jnp.transpose(t, (0, 2, 1, 3)) for t in (q, k, v))
        s = jnp.einsum('bhqd,bhkd->bhqk', q, k) / math.sqrt(dh)
        p = jax.nn.softmax(s, axis=-1)
        o = jnp.einsum('bhqk,bhkd->bhqd', p, v)
        o = jnp.transpose(o, (0, 2, 1, 3)).reshape(B * S, D)
        k_out = o @ params["wo"] + params["bo"]
        hw = jnp.concatenate([w_hat.reshape(B * S, -1), k_out], axis=-1)
        mean = hw @ params["w1"] + params["b1"]
        std = jax.nn.softplus(hw @ params["w2"] + params["b2"])
    Dl = hw.shape[-1]
    z = mean + noise.reshape(B * S, Dl) * std
    rs = lambda t: t.reshape(B, S, Dl)
    return rs(z), rs(mean), rs(std)


def make_params(key, d_model, d_latent):
    ks = jax.random.split(key, 12)
    u = lambda k, shp, fan_in: jax.random.uniform(
        k, shp, jnp.float32, -1.0 / math.sqrt(fan_in), 1.0 / math.sqrt(fan_in))
    return {
        "wq": u(ks[0], (d_model, d_model), d_model), "bq": u(ks[1], (1, d_model), d_model),
        "wk": u(ks[2], (d_model, d_model), d_model), "bk": u(ks[3], (1, d_model), d_model),
        "wv": u(ks[4], (d_model, d_model), d_model), "bv": u(ks[5], (1, d_model), d_model),
        "wo": u(ks[6], (d_model, d_model), d_model), "bo": u(ks[7], (1, d_model), d_model),
        "w1": u(ks[8], (d_latent, d_latent), d_latent), "b1": u(ks[9], (1, d_latent), d_latent),
        "w2": u(ks[10], (d_latent, d_latent), d_latent), "b2": u(ks[11], (1, d_latent), d_latent),
    }


if __name__ == "__main__":
    B, S = 2, 8
    d_model, num_heads = 32, 4
    d_w = 32
    d_latent = d_w + d_model  # dense layers take concat([w_hat, k]) of width d_latent

    key = jax.random.PRNGKey(0)
    k_h, k_w, k_n, k_p = jax.random.split(key, 4)
    h_T = jax.random.normal(k_h, (B, S, d_model), jnp.float32)
    w_hat = jax.random.normal(k_w, (B, S, d_w), jnp.float32)
    noise = jax.random.normal(k_n, (B, S, d_latent), jnp.float32)
    params = make_params(k_p, d_model, d_latent)

    # One-time parameter preprocessing (hoisted out of the forward path).
    prep = prepare_params(params, d_model, d_w)

    z, mean, std = inf_layer(h_T, w_hat, noise, prep, num_heads=num_heads)
    jax.block_until_ready((z, mean, std))

    # Correctness against a pure-JAX reference (loose tolerance for MXU precision).
    z_r, mean_r, std_r = inf_layer_ref(h_T, w_hat, noise, params, num_heads=num_heads)
    assert z.shape == (B, S, d_latent) and mean.shape == z.shape and std.shape == z.shape
    assert bool(jnp.all(jnp.isfinite(z)))
    assert bool(jnp.all(jnp.isfinite(mean)))
    assert bool(jnp.all(std > 0.0))
    assert bool(jnp.allclose(mean, mean_r, atol=5e-2, rtol=5e-2))
    assert bool(jnp.allclose(std, std_r, atol=5e-2, rtol=5e-2))
    assert bool(jnp.allclose(z, z_r, atol=5e-2, rtol=5e-2))
    print("KERNEL_OK")
</pallas_src>

<mosaic_0001>
module attributes {stable_mosaic.version = 11 : i64} {
  func.func @inf_layer_kernel(%arg0: i32, %arg1: memref<16x32xf32, #tpu.memory_space<vmem>>, %arg2: memref<16x32xf32, #tpu.memory_space<vmem>>, %arg3: memref<16x64xf32, #tpu.memory_space<vmem>>, %arg4: memref<32x384xf32, #tpu.memory_space<vmem>>, %arg5: memref<1x384xf32, #tpu.memory_space<vmem>>, %arg6: memref<128x32xf32, #tpu.memory_space<vmem>>, %arg7: memref<1x32xf32, #tpu.memory_space<vmem>>, %arg8: memref<32x128xf32, #tpu.memory_space<vmem>>, %arg9: memref<32x128xf32, #tpu.memory_space<vmem>>, %arg10: memref<1x128xf32, #tpu.memory_space<vmem>>, %arg11: memref<16x192xf32, #tpu.memory_space<vmem>>) attributes {dimension_semantics = [#tpu.dimension_semantics<arbitrary>], iteration_bounds = array<i64: 1>, scalar_prefetch = 0 : i64, scratch_operands = 0 : i64, tpu.core_type = #tpu.core_type<tc>, window_params = [{pipeline_mode = #tpu.pipeline_mode<synchronous>, transform_indices = @transform_0, window_bounds = array<i64: 16, 32>}, {pipeline_mode = #tpu.pipeline_mode<synchronous>, transform_indices = @transform_1, window_bounds = array<i64: 16, 32>}, {pipeline_mode = #tpu.pipeline_mode<synchronous>, transform_indices = @transform_2, window_bounds = array<i64: 16, 64>}, {pipeline_mode = #tpu.pipeline_mode<synchronous>, transform_indices = @transform_3, window_bounds = array<i64: 32, 384>}, {pipeline_mode = #tpu.pipeline_mode<synchronous>, transform_indices = @transform_4, window_bounds = array<i64: 1, 384>}, {pipeline_mode = #tpu.pipeline_mode<synchronous>, transform_indices = @transform_5, window_bounds = array<i64: 128, 32>}, {pipeline_mode = #tpu.pipeline_mode<synchronous>, transform_indices = @transform_6, window_bounds = array<i64: 1, 32>}, {pipeline_mode = #tpu.pipeline_mode<synchronous>, transform_indices = @transform_7, window_bounds = array<i64: 32, 128>}, {pipeline_mode = #tpu.pipeline_mode<synchronous>, transform_indices = @transform_8, window_bounds = array<i64: 32, 128>}, {pipeline_mode = #tpu.pipeline_mode<synchronous>, transform_indices = @transform_9, window_bounds = array<i64: 1, 128>}, {pipeline_mode = #tpu.pipeline_mode<synchronous>, transform_indices = @transform_10, window_bounds = array<i64: 16, 192>}]} {
    %c0 = arith.constant 0 : index
    %c0_0 = arith.constant 0 : index
    %0 = vector.load %arg1[%c0, %c0_0] : memref<16x32xf32, #tpu.memory_space<vmem>>, vector<16x32xf32>
    %c0_1 = arith.constant 0 : index
    %c0_2 = arith.constant 0 : index
    %1 = vector.load %arg4[%c0_1, %c0_2] : memref<32x384xf32, #tpu.memory_space<vmem>>, vector<32x384xf32>
    %cst = arith.constant dense<0.000000e+00> : vector<16x384xf32>
    %2 = tpu.matmul %0, %1, %cst {dimension_numbers = #tpu.dot_dimension_numbers<[1], [0], [0], [1], [0, 0, 1, 1], [], []>} : vector<16x32xf32>, vector<32x384xf32>, vector<16x384xf32> -> vector<16x384xf32>
    %c0_3 = arith.constant 0 : index
    %c0_4 = arith.constant 0 : index
    %3 = vector.load %arg5[%c0_3, %c0_4] : memref<1x384xf32, #tpu.memory_space<vmem>>, vector<1x384xf32>
    %4 = vector.broadcast %3 : vector<1x384xf32> to vector<16x384xf32>
    %5 = arith.addf %2, %4 : vector<16x384xf32>
    %6 = vector.extract_strided_slice %5 {offsets = [0, 0], sizes = [16, 128], strides = [1, 1]} : vector<16x384xf32> to vector<16x128xf32>
    %7 = vector.shape_cast %6 : vector<16x128xf32> to vector<2x8x128xf32>
    %8 = vector.extract_strided_slice %5 {offsets = [0, 128], sizes = [16, 128], strides = [1, 1]} : vector<16x384xf32> to vector<16x128xf32>
    %9 = vector.shape_cast %8 : vector<16x128xf32> to vector<2x8x128xf32>
    %10 = vector.extract_strided_slice %5 {offsets = [0, 256], sizes = [16, 128], strides = [1, 1]} : vector<16x384xf32> to vector<16x128xf32>
    %11 = vector.shape_cast %10 : vector<16x128xf32> to vector<2x8x128xf32>
    %12 = tpu.iota {dimensions = array<i32: 2>} : vector<2x8x128xi32>
    %c0_i32 = arith.constant 0 : i32
    %13 = vector.broadcast %c0_i32 : i32 to vector<2x8x128xi32>
    %14 = arith.cmpi sge, %12, %13 : vector<2x8x128xi32>
    %c8_i32 = arith.constant 8 : i32
    %15 = vector.broadcast %c8_i32 : i32 to vector<2x8x128xi32>
    %16 = arith.cmpi slt, %12, %15 : vector<2x8x128xi32>
    %17 = arith.andi %14, %16 : vector<2x8x128xi1>
    %cst_5 = arith.constant 0.000000e+00 : f32
    %18 = vector.broadcast %cst_5 : f32 to vector<2x8x128xf32>
    %19 = arith.select %17, %7, %18 : vector<2x8x128xi1>, vector<2x8x128xf32>
    "tpu.trace_start"() <{level = 10 : i32, message = "bqd,bkd->bqk"}> : () -> ()
    %cst_6 = arith.constant dense<0.000000e+00> : vector<2x8x8xf32>
    %20 = tpu.matmul %19, %9, %cst_6 {dimension_numbers = #tpu.dot_dimension_numbers<[2], [2], [1], [1], [0, 0, 0, 1, 1, 1], [0], [0]>} : vector<2x8x128xf32>, vector<2x8x128xf32>, vector<2x8x8xf32> -> vector<2x8x8xf32>
    "tpu.trace_stop"() : () -> ()
    %cst_7 = arith.constant 0.353553385 : f32
    %21 = vector.broadcast %cst_7 : f32 to vector<2x8x8xf32>
    %22 = arith.mulf %20, %21 : vector<2x8x8xf32>
    %cst_8 = arith.constant dense<0xFF800000> : vector<2x8xf32>
    %23 = vector.multi_reduction <maximumf>, %22, %cst_8 [2] : vector<2x8x8xf32> to vector<2x8xf32>
    %24 = vector.shape_cast %23 : vector<2x8xf32> to vector<2x8x1xf32>
    %25 = vector.broadcast %24 : vector<2x8x1xf32> to vector<2x8x8xf32>
    %26 = arith.subf %22, %25 : vector<2x8x8xf32>
    %27 = math.exp %26 : vector<2x8x8xf32>
    %cst_9 = arith.constant dense<0.000000e+00> : vector<2x8xf32>
    %28 = vector.multi_reduction <add>, %27, %cst_9 [2] : vector<2x8x8xf32> to vector<2x8xf32>
    %29 = vector.shape_cast %28 : vector<2x8xf32> to vector<2x8x1xf32>
    %30 = vector.broadcast %29 : vector<2x8x1xf32> to vector<2x8x8xf32>
    %31 = arith.divf %27, %30 : vector<2x8x8xf32>
    %cst_10 = arith.constant 0.000000e+00 : f32
    %32 = vector.broadcast %cst_10 : f32 to vector<2x8x128xf32>
    %33 = arith.select %17, %11, %32 : vector<2x8x128xi1>, vector<2x8x128xf32>
    "tpu.trace_start"() <{level = 10 : i32, message = "bqk,bkd->bqd"}> : () -> ()
    %cst_11 = arith.constant dense<0.000000e+00> : vector<2x8x128xf32>
    %34 = tpu.matmul %31, %33, %cst_11 {dimension_numbers = #tpu.dot_dimension_numbers<[2], [1], [1], [2], [0, 0, 0, 1, 1, 2], [0], [0]>} : vector<2x8x8xf32>, vector<2x8x128xf32>, vector<2x8x128xf32> -> vector<2x8x128xf32>
    %c8_i32_12 = arith.constant 8 : i32
    "tpu.trace_stop"() : () -> ()
    %35 = vector.broadcast %c8_i32_12 : i32 to vector<2x8x128xi32>
    %36 = arith.cmpi sge, %12, %35 : vector<2x8x128xi32>
    %c16_i32 = arith.constant 16 : i32
    %37 = vector.broadcast %c16_i32 : i32 to vector<2x8x128xi32>
    %38 = arith.cmpi slt, %12, %37 : vector<2x8x128xi32>
    %39 = arith.andi %36, %38 : vector<2x8x128xi1>
    %cst_13 = arith.constant 0.000000e+00 : f32
    %40 = vector.broadcast %cst_13 : f32 to vector<2x8x128xf32>
    %41 = arith.select %39, %7, %40 : vector<2x8x128xi1>, vector<2x8x128xf32>
    "tpu.trace_start"() <{level = 10 : i32, message = "bqd,bkd->bqk"}> : () -> ()
    %cst_14 = arith.constant dense<0.000000e+00> : vector<2x8x8xf32>
    %42 = tpu.matmul %41, %9, %cst_14 {dimension_numbers = #tpu.dot_dimension_numbers<[2], [2], [1], [1], [0, 0, 0, 1, 1, 1], [0], [0]>} : vector<2x8x128xf32>, vector<2x8x128xf32>, vector<2x8x8xf32> -> vector<2x8x8xf32>
    "tpu.trace_stop"() : () -> ()
    %cst_15 = arith.constant 0.353553385 : f32
    %43 = vector.broadcast %cst_15 : f32 to vector<2x8x8xf32>
    %44 = arith.mulf %42, %43 : vector<2x8x8xf32>
    %cst_16 = arith.constant dense<0xFF800000> : vector<2x8xf32>
    %45 = vector.multi_reduction <maximumf>, %44, %cst_16 [2] : vector<2x8x8xf32> to vector<2x8xf32>
    %46 = vector.shape_cast %45 : vector<2x8xf32> to vector<2x8x1xf32>
    %47 = vector.broadcast %46 : vector<2x8x1xf32> to vector<2x8x8xf32>
    %48 = arith.subf %44, %47 : vector<2x8x8xf32>
    %49 = math.exp %48 : vector<2x8x8xf32>
    %cst_17 = arith.constant dense<0.000000e+00> : vector<2x8xf32>
    %50 = vector.multi_reduction <add>, %49, %cst_17 [2] : vector<2x8x8xf32> to vector<2x8xf32>
    %51 = vector.shape_cast %50 : vector<2x8xf32> to vector<2x8x1xf32>
    %52 = vector.broadcast %51 : vector<2x8x1xf32> to vector<2x8x8xf32>
    %53 = arith.divf %49, %52 : vector<2x8x8xf32>
    %cst_18 = arith.constant 0.000000e+00 : f32
    %54 = vector.broadcast %cst_18 : f32 to vector<2x8x128xf32>
    %55 = arith.select %39, %11, %54 : vector<2x8x128xi1>, vector<2x8x128xf32>
    "tpu.trace_start"() <{level = 10 : i32, message = "bqk,bkd->bqd"}> : () -> ()
    %cst_19 = arith.constant dense<0.000000e+00> : vector<2x8x128xf32>
    %56 = tpu.matmul %53, %55, %cst_19 {dimension_numbers = #tpu.dot_dimension_numbers<[2], [1], [1], [2], [0, 0, 0, 1, 1, 2], [0], [0]>} : vector<2x8x8xf32>, vector<2x8x128xf32>, vector<2x8x128xf32> -> vector<2x8x128xf32>
    "tpu.trace_stop"() : () -> ()
    %57 = arith.addf %34, %56 : vector<2x8x128xf32>
    %c16_i32_20 = arith.constant 16 : i32
    %58 = vector.broadcast %c16_i32_20 : i32 to vector<2x8x128xi32>
    %59 = arith.cmpi sge, %12, %58 : vector<2x8x128xi32>
    %c24_i32 = arith.constant 24 : i32
    %60 = vector.broadcast %c24_i32 : i32 to vector<2x8x128xi32>
    %61 = arith.cmpi slt, %12, %60 : vector<2x8x128xi32>
    %62 = arith.andi %59, %61 : vector<2x8x128xi1>
    %cst_21 = arith.constant 0.000000e+00 : f32
    %63 = vector.broadcast %cst_21 : f32 to vector<2x8x128xf32>
    %64 = arith.select %62, %7, %63 : vector<2x8x128xi1>, vector<2x8x128xf32>
    "tpu.trace_start"() <{level = 10 : i32, message = "bqd,bkd->bqk"}> : () -> ()
    %cst_22 = arith.constant dense<0.000000e+00> : vector<2x8x8xf32>
    %65 = tpu.matmul %64, %9, %cst_22 {dimension_numbers = #tpu.dot_dimension_numbers<[2], [2], [1], [1], [0, 0, 0, 1, 1, 1], [0], [0]>} : vector<2x8x128xf32>, vector<2x8x128xf32>, vector<2x8x8xf32> -> vector<2x8x8xf32>
    "tpu.trace_stop"() : () -> ()
    %cst_23 = arith.constant 0.353553385 : f32
    %66 = vector.broadcast %cst_23 : f32 to vector<2x8x8xf32>
    %67 = arith.mulf %65, %66 : vector<2x8x8xf32>
    %cst_24 = arith.constant dense<0xFF800000> : vector<2x8xf32>
    %68 = vector.multi_reduction <maximumf>, %67, %cst_24 [2] : vector<2x8x8xf32> to vector<2x8xf32>
    %69 = vector.shape_cast %68 : vector<2x8xf32> to vector<2x8x1xf32>
    %70 = vector.broadcast %69 : vector<2x8x1xf32> to vector<2x8x8xf32>
    %71 = arith.subf %67, %70 : vector<2x8x8xf32>
    %72 = math.exp %71 : vector<2x8x8xf32>
    %cst_25 = arith.constant dense<0.000000e+00> : vector<2x8xf32>
    %73 = vector.multi_reduction <add>, %72, %cst_25 [2] : vector<2x8x8xf32> to vector<2x8xf32>
    %74 = vector.shape_cast %73 : vector<2x8xf32> to vector<2x8x1xf32>
    %75 = vector.broadcast %74 : vector<2x8x1xf32> to vector<2x8x8xf32>
    %76 = arith.divf %72, %75 : vector<2x8x8xf32>
    %cst_26 = arith.constant 0.000000e+00 : f32
    %77 = vector.broadcast %cst_26 : f32 to vector<2x8x128xf32>
    %78 = arith.select %62, %11, %77 : vector<2x8x128xi1>, vector<2x8x128xf32>
    "tpu.trace_start"() <{level = 10 : i32, message = "bqk,bkd->bqd"}> : () -> ()
    %cst_27 = arith.constant dense<0.000000e+00> : vector<2x8x128xf32>
    %79 = tpu.matmul %76, %78, %cst_27 {dimension_numbers = #tpu.dot_dimension_numbers<[2], [1], [1], [2], [0, 0, 0, 1, 1, 2], [0], [0]>} : vector<2x8x8xf32>, vector<2x8x128xf32>, vector<2x8x128xf32> -> vector<2x8x128xf32>
    "tpu.trace_stop"() : () -> ()
    %80 = arith.addf %57, %79 : vector<2x8x128xf32>
    %c24_i32_28 = arith.constant 24 : i32
    %81 = vector.broadcast %c24_i32_28 : i32 to vector<2x8x128xi32>
    %82 = arith.cmpi sge, %12, %81 : vector<2x8x128xi32>
    %c32_i32 = arith.constant 32 : i32
    %83 = vector.broadcast %c32_i32 : i32 to vector<2x8x128xi32>
    %84 = arith.cmpi slt, %12, %83 : vector<2x8x128xi32>
    %85 = arith.andi %82, %84 : vector<2x8x128xi1>
    %cst_29 = arith.constant 0.000000e+00 : f32
    %86 = vector.broadcast %cst_29 : f32 to vector<2x8x128xf32>
    %87 = arith.select %85, %7, %86 : vector<2x8x128xi1>, vector<2x8x128xf32>
    "tpu.trace_start"() <{level = 10 : i32, message = "bqd,bkd->bqk"}> : () -> ()
    %cst_30 = arith.constant dense<0.000000e+00> : vector<2x8x8xf32>
    %88 = tpu.matmul %87, %9, %cst_30 {dimension_numbers = #tpu.dot_dimension_numbers<[2], [2], [1], [1], [0, 0, 0, 1, 1, 1], [0], [0]>} : vector<2x8x128xf32>, vector<2x8x128xf32>, vector<2x8x8xf32> -> vector<2x8x8xf32>
    "tpu.trace_stop"() : () -> ()
    %cst_31 = arith.constant 0.353553385 : f32
    %89 = vector.broadcast %cst_31 : f32 to vector<2x8x8xf32>
    %90 = arith.mulf %88, %89 : vector<2x8x8xf32>
    %cst_32 = arith.constant dense<0xFF800000> : vector<2x8xf32>
    %91 = vector.multi_reduction <maximumf>, %90, %cst_32 [2] : vector<2x8x8xf32> to vector<2x8xf32>
    %92 = vector.shape_cast %91 : vector<2x8xf32> to vector<2x8x1xf32>
    %93 = vector.broadcast %92 : vector<2x8x1xf32> to vector<2x8x8xf32>
    %94 = arith.subf %90, %93 : vector<2x8x8xf32>
    %95 = math.exp %94 : vector<2x8x8xf32>
    %cst_33 = arith.constant dense<0.000000e+00> : vector<2x8xf32>
    %96 = vector.multi_reduction <add>, %95, %cst_33 [2] : vector<2x8x8xf32> to vector<2x8xf32>
    %97 = vector.shape_cast %96 : vector<2x8xf32> to vector<2x8x1xf32>
    %98 = vector.broadcast %97 : vector<2x8x1xf32> to vector<2x8x8xf32>
    %99 = arith.divf %95, %98 : vector<2x8x8xf32>
    %cst_34 = arith.constant 0.000000e+00 : f32
    %100 = vector.broadcast %cst_34 : f32 to vector<2x8x128xf32>
    %101 = arith.select %85, %11, %100 : vector<2x8x128xi1>, vector<2x8x128xf32>
    "tpu.trace_start"() <{level = 10 : i32, message = "bqk,bkd->bqd"}> : () -> ()
    %cst_35 = arith.constant dense<0.000000e+00> : vector<2x8x128xf32>
    %102 = tpu.matmul %99, %101, %cst_35 {dimension_numbers = #tpu.dot_dimension_numbers<[2], [1], [1], [2], [0, 0, 0, 1, 1, 2], [0], [0]>} : vector<2x8x8xf32>, vector<2x8x128xf32>, vector<2x8x128xf32> -> vector<2x8x128xf32>
    "tpu.trace_stop"() : () -> ()
    %103 = arith.addf %80, %102 : vector<2x8x128xf32>
    %104 = vector.shape_cast %103 : vector<2x8x128xf32> to vector<16x128xf32>
    %c0_36 = arith.constant 0 : index
    %c0_37 = arith.constant 0 : index
    %105 = vector.load %arg6[%c0_36, %c0_37] : memref<128x32xf32, #tpu.memory_space<vmem>>, vector<128x32xf32>
    %cst_38 = arith.constant dense<0.000000e+00> : vector<16x32xf32>
    %106 = tpu.matmul %104, %105, %cst_38 {dimension_numbers = #tpu.dot_dimension_numbers<[1], [0], [0], [1], [0, 0, 1, 1], [], []>} : vector<16x128xf32>, vector<128x32xf32>, vector<16x32xf32> -> vector<16x32xf32>
    %c0_39 = arith.constant 0 : index
    %c0_40 = arith.constant 0 : index
    %107 = vector.load %arg7[%c0_39, %c0_40] : memref<1x32xf32, #tpu.memory_space<vmem>>, vector<1x32xf32>
    %108 = vector.broadcast %107 : vector<1x32xf32> to vector<16x32xf32>
    %109 = arith.addf %106, %108 : vector<16x32xf32>
    %c0_41 = arith.constant 0 : index
    %c0_42 = arith.constant 0 : index
    %110 = vector.load %arg2[%c0_41, %c0_42] : memref<16x32xf32, #tpu.memory_space<vmem>>, vector<16x32xf32>
    %c0_43 = arith.constant 0 : index
    %c0_44 = arith.constant 0 : index
    %111 = vector.load %arg8[%c0_43, %c0_44] : memref<32x128xf32, #tpu.memory_space<vmem>>, vector<32x128xf32>
    %cst_45 = arith.constant dense<0.000000e+00> : vector<16x128xf32>
    %112 = tpu.matmul %110, %111, %cst_45 {dimension_numbers = #tpu.dot_dimension_numbers<[1], [0], [0], [1], [0, 0, 1, 1], [], []>} : vector<16x32xf32>, vector<32x128xf32>, vector<16x128xf32> -> vector<16x128xf32>
    %c0_46 = arith.constant 0 : index
    %c0_47 = arith.constant 0 : index
    %113 = vector.load %arg9[%c0_46, %c0_47] : memref<32x128xf32, #tpu.memory_space<vmem>>, vector<32x128xf32>
    %cst_48 = arith.constant dense<0.000000e+00> : vector<16x128xf32>
    %114 = tpu.matmul %109, %113, %cst_48 {dimension_numbers = #tpu.dot_dimension_numbers<[1], [0], [0], [1], [0, 0, 1, 1], [], []>} : vector<16x32xf32>, vector<32x128xf32>, vector<16x128xf32> -> vector<16x128xf32>
    %115 = arith.addf %112, %114 : vector<16x128xf32>
    %c0_49 = arith.constant 0 : index
    %c0_50 = arith.constant 0 : index
    %116 = vector.load %arg10[%c0_49, %c0_50] : memref<1x128xf32, #tpu.memory_space<vmem>>, vector<1x128xf32>
    %117 = vector.broadcast %116 : vector<1x128xf32> to vector<16x128xf32>
    %118 = arith.addf %115, %117 : vector<16x128xf32>
    %119 = tpu.iota {dimensions = array<i32: 1>} : vector<16x128xi32>
    %c64_i32 = arith.constant 64 : i32
    %120 = vector.broadcast %c64_i32 : i32 to vector<16x128xi32>
    %121 = arith.cmpi sge, %119, %120 : vector<16x128xi32>
    %cst_51 = arith.constant 2.000000e+01 : f32
    %122 = vector.broadcast %cst_51 : f32 to vector<16x128xf32>
    %123 = arith.minimumf %118, %122 : vector<16x128xf32>
    %cst_52 = arith.constant 2.000000e+01 : f32
    %124 = vector.broadcast %cst_52 : f32 to vector<16x128xf32>
    %125 = arith.cmpf ogt, %118, %124 : vector<16x128xf32>
    %126 = math.exp %123 : vector<16x128xf32>
    %127 = math.log1p %126 : vector<16x128xf32>
    %128 = arith.select %125, %118, %127 : vector<16x128xi1>, vector<16x128xf32>
    %129 = arith.select %121, %128, %118 : vector<16x128xi1>, vector<16x128xf32>
    %c0_53 = arith.constant 0 : index
    %c0_54 = arith.constant 0 : index
    %130 = vector.load %arg11[%c0_53, %c0_54] : memref<16x192xf32, #tpu.memory_space<vmem>>, vector<16x128xf32>
    tpu.vector_store %arg11[%c0_53, %c0_54], %129 {strides = array<i32>} : memref<16x192xf32, #tpu.memory_space<vmem>>, vector<16x128xf32>,
    %131 = vector.extract_strided_slice %118 {offsets = [0, 0], sizes = [16, 64], strides = [1, 1]} : vector<16x128xf32> to vector<16x64xf32>
    %132 = vector.extract_strided_slice %129 {offsets = [0, 64], sizes = [16, 64], strides = [1, 1]} : vector<16x128xf32> to vector<16x64xf32>
    %c0_55 = arith.constant 0 : index
    %c0_56 = arith.constant 0 : index
    %133 = vector.load %arg3[%c0_55, %c0_56] : memref<16x64xf32, #tpu.memory_space<vmem>>, vector<16x64xf32>
    %134 = arith.mulf %133, %132 : vector<16x64xf32>
    %135 = arith.addf %131, %134 : vector<16x64xf32>
    %c0_57 = arith.constant 0 : index
    %c128 = arith.constant 128 : index
    %136 = vector.load %arg11[%c0_57, %c128] : memref<16x192xf32, #tpu.memory_space<vmem>>, vector<16x64xf32>
    tpu.vector_store %arg11[%c0_57, %c128], %135 {strides = array<i32>} : memref<16x192xf32, #tpu.memory_space<vmem>>, vector<16x64xf32>,
    return
  }
  func.func @transform_0(%arg0: i32) -> (i32, i32) {
    %c0_i32 = arith.constant 0 : i32
    %c0_i32_0 = arith.constant 0 : i32
    %c0_i32_1 = arith.constant 0 : i32
    return %c0_i32, %c0_i32_0 : i32, i32
  }
  func.func @transform_1(%arg0: i32) -> (i32, i32) {
    %c0_i32 = arith.constant 0 : i32
    %c0_i32_0 = arith.constant 0 : i32
    %c0_i32_1 = arith.constant 0 : i32
    return %c0_i32, %c0_i32_0 : i32, i32
  }
  func.func @transform_2(%arg0: i32) -> (i32, i32) {
    %c0_i32 = arith.constant 0 : i32
    %c0_i32_0 = arith.constant 0 : i32
    %c0_i32_1 = arith.constant 0 : i32
    return %c0_i32, %c0_i32_0 : i32, i32
  }
  func.func @transform_3(%arg0: i32) -> (i32, i32) {
    %c0_i32 = arith.constant 0 : i32
    %c0_i32_0 = arith.constant 0 : i32
    %c0_i32_1 = arith.constant 0 : i32
    return %c0_i32, %c0_i32_0 : i32, i32
  }
  func.func @transform_4(%arg0: i32) -> (i32, i32) {
    %c0_i32 = arith.constant 0 : i32
    %c0_i32_0 = arith.constant 0 : i32
    %c0_i32_1 = arith.constant 0 : i32
    return %c0_i32, %c0_i32_0 : i32, i32
  }
  func.func @transform_5(%arg0: i32) -> (i32, i32) {
    %c0_i32 = arith.constant 0 : i32
    %c0_i32_0 = arith.constant 0 : i32
    %c0_i32_1 = arith.constant 0 : i32
    return %c0_i32, %c0_i32_0 : i32, i32
  }
  func.func @transform_6(%arg0: i32) -> (i32, i32) {
    %c0_i32 = arith.constant 0 : i32
    %c0_i32_0 = arith.constant 0 : i32
    %c0_i32_1 = arith.constant 0 : i32
    return %c0_i32, %c0_i32_0 : i32, i32
  }
  func.func @transform_7(%arg0: i32) -> (i32, i32) {
    %c0_i32 = arith.constant 0 : i32
    %c0_i32_0 = arith.constant 0 : i32
    %c0_i32_1 = arith.constant 0 : i32
    return %c0_i32, %c0_i32_0 : i32, i32
  }
  func.func @transform_8(%arg0: i32) -> (i32, i32) {
    %c0_i32 = arith.constant 0 : i32
    %c0_i32_0 = arith.constant 0 : i32
    %c0_i32_1 = arith.constant 0 : i32
    return %c0_i32, %c0_i32_0 : i32, i32
  }
  func.func @transform_9(%arg0: i32) -> (i32, i32) {
    %c0_i32 = arith.constant 0 : i32
    %c0_i32_0 = arith.constant 0 : i32
    %c0_i32_1 = arith.constant 0 : i32
    return %c0_i32, %c0_i32_0 : i32, i32
  }
  func.func @transform_10(%arg0: i32) -> (i32, i32) {
    %c0_i32 = arith.constant 0 : i32
    %c0_i32_0 = arith.constant 0 : i32
    %c0_i32_1 = arith.constant 0 : i32
    return %c0_i32, %c0_i32_0 : i32, i32
  }
}

</mosaic_0001>

<llo_original>
// kernel: tpu_custom_call.1
$region0: #{tpu_custom_call.1}
  #allocation0 [shape = 'u32[]', space=smem, size = 0x4, offset = 0x4, fixed_abs, tag = 'smem constant byte address 0x4 - core index']
  #allocation1 [shape = 'u32[72,128]{1,0:T(1,128)}', space=vmem, size = 0x9000, scoped, tag = 'internal scratch']
  %s0 = inlined_call_operand.hbm [shape: f32[16,32], index: 0, kind: input, shape index: {}]
  %s1 = inlined_call_operand.hbm [shape: f32[16,32], index: 1, kind: input, shape index: {}]
  %s2 = inlined_call_operand.hbm [shape: f32[16,64], index: 2, kind: input, shape index: {}]
  %s3 = inlined_call_operand.vmem [shape: f32[32,384], index: 3, kind: input, shape index: {}]
  %s4 = inlined_call_operand.vmem [shape: f32[1,384], index: 4, kind: input, shape index: {}]
  %s5 = inlined_call_operand.vmem [shape: f32[128,32], index: 5, kind: input, shape index: {}]
  %s6 = inlined_call_operand.vmem [shape: f32[1,32], index: 6, kind: input, shape index: {}]
  %s7 = inlined_call_operand.vmem [shape: f32[32,128], index: 7, kind: input, shape index: {}]
  %s8 = inlined_call_operand.vmem [shape: f32[32,128], index: 8, kind: input, shape index: {}]
  %s9 = inlined_call_operand.vmem [shape: f32[1,128], index: 9, kind: input, shape index: {}]
  %s10 = inlined_call_operand.hbm [shape: f32[16,192], index: 10, kind: output, shape index: {}]
  %s11 = sld [smem:[#allocation0]]
  $region62: #{tpu_custom_call.1} parent=0
    _
  %s13 = ssub.s32 1, %s11
  %s14 = scalar_select 0, %s13, %s11
  $region1: #{tpu_custom_call.1} parent=0
    #allocation2 [shape = 'u8[8192]{0}', space=vmem, size = 0x2000, scoped, tag = 'input window, operand 0, single buffered']
    #allocation3 [shape = 's32[1]{0}', space=sflag, size = 0x4, scoped, tag = 'scoped memory for tpu_custom_call.1']
    #allocation4 [shape = 's32[1]{0}', space=sflag, size = 0x4, scoped, tag = 'scoped memory for tpu_custom_call.1']
    #allocation5 [shape = 'u8[8192]{0}', space=vmem, size = 0x2000, scoped, tag = 'input window, operand 1, single buffered']
    #allocation6 [shape = 's32[1]{0}', space=sflag, size = 0x4, scoped, tag = 'scoped memory for tpu_custom_call.1']
    #allocation7 [shape = 'u8[8192]{0}', space=vmem, size = 0x2000, scoped, tag = 'input window, operand 2, single buffered']
    #allocation8 [shape = 'u8[16384]{0}', space=vmem, size = 0x4000, scoped, tag = 'output window, operand 0, single buffered']
    %15 = vsyncpa [#allocation3], 0
    %16 = vsyncpa [#allocation6], 0
    %17 = vsyncpa [#allocation4], 0
    // Predicated region
    $region2: #{tpu_custom_call.1} parent=1 // pred_check
      _
    $region3: #{tpu_custom_call.1} parent=1 // pred_check_branch
      %19 = sbr.rel (0) target = $region5
    $region4: #{tpu_custom_call.1} parent=1 // pred_region
      %21 = vsyncadd [#allocation3], 0
      %s22 = sshll.u32 %s0, 4
      %s23 = int_to_ptr.hbm [resolvable:$true] %s22
      %s24 = sshll.u32 [#allocation2], 4
      %s25 = int_to_ptr.vmem [resolvable:$true] %s24
      %30 = dma.hbm_to_vmem [thread:$0]  %s23, 256, %s25, [#allocation3], 128, 128, 8
    $region5: #{tpu_custom_call.1} parent=1 // pred_fallthru
      _
    // Predicated region
    $region6: #{tpu_custom_call.1} parent=1 // pred_check
      _
    $region7: #{tpu_custom_call.1} parent=1 // pred_check_branch
      %32 = sbr.rel (0) target = $region9
    $region8: #{tpu_custom_call.1} parent=1 // pred_region
      %34 = vsyncadd [#allocation6], 0
      %s35 = sshll.u32 %s1, 4
      %s36 = int_to_ptr.hbm [resolvable:$true] %s35
      %s37 = sshll.u32 [#allocation5], 4
      %s38 = int_to_ptr.vmem [resolvable:$true] %s37
      %43 = dma.hbm_to_vmem [thread:$0]  %s36, 256, %s38, [#allocation6], 128, 128, 8
    $region9: #{tpu_custom_call.1} parent=1 // pred_fallthru
      _
    // Predicated region
    $region10: #{tpu_custom_call.1} parent=1 // pred_check
      _
    $region11: #{tpu_custom_call.1} parent=1 // pred_check_branch
      %45 = sbr.rel (0) target = $region13
    $region12: #{tpu_custom_call.1} parent=1 // pred_region
      %47 = vsyncadd [#allocation6], 0
      %s48 = sshll.u32 %s2, 4
      %s49 = int_to_ptr.hbm [resolvable:$true] %s48
      %s50 = sshll.u32 [#allocation7], 4
      %s51 = int_to_ptr.vmem [resolvable:$true] %s50
      %56 = dma.hbm_to_vmem [thread:$0]  %s49, 256, %s51, [#allocation6], 128, 128, 8
    $region13: #{tpu_custom_call.1} parent=1 // pred_fallthru
      _
    // Predicated region
    $region14: #{tpu_custom_call.1} parent=1 // pred_check
      _
    $region15: #{tpu_custom_call.1} parent=1 // pred_check_branch
      %58 = sbr.rel (0) target = $region17
    $region16: #{tpu_custom_call.1} parent=1 // pred_region
      _
    $region17: #{tpu_custom_call.1} parent=1 // pred_fallthru
      _
    // Predicated region
    $region18: #{tpu_custom_call.1} parent=1 // pred_check
      _
    $region19: #{tpu_custom_call.1} parent=1 // pred_check_branch
      %60 = sbr.rel (0) target = $region21
    $region20: #{tpu_custom_call.1} parent=1 // pred_region
      _
    $region21: #{tpu_custom_call.1} parent=1 // pred_fallthru
      _
    // Predicated region
    $region22: #{tpu_custom_call.1} parent=1 // pred_check
      _
    $region23: #{tpu_custom_call.1} parent=1 // pred_check_branch
      %62 = sbr.rel (0) target = $region25
    $region24: #{tpu_custom_call.1} parent=1 // pred_region
      _
    $region25: #{tpu_custom_call.1} parent=1 // pred_fallthru
      _
    // Predicated region
    $region26: #{tpu_custom_call.1} parent=1 // pred_check
      _
    $region27: #{tpu_custom_call.1} parent=1 // pred_check_branch
      %64 = sbr.rel (0) target = $region29
    $region28: #{tpu_custom_call.1} parent=1 // pred_region
      _
    $region29: #{tpu_custom_call.1} parent=1 // pred_fallthru
      _
    // Predicated region
    $region30: #{tpu_custom_call.1} parent=1 // pred_check
      _
    $region31: #{tpu_custom_call.1} parent=1 // pred_check_branch
      %66 = sbr.rel (0) target = $region33
    $region32: #{tpu_custom_call.1} parent=1 // pred_region
      _
    $region33: #{tpu_custom_call.1} parent=1 // pred_fallthru
      _
    // Predicated region
    $region34: #{tpu_custom_call.1} parent=1 // pred_check
      _
    $region35: #{tpu_custom_call.1} parent=1 // pred_check_branch
      %68 = sbr.rel (0) target = $region37
    $region36: #{tpu_custom_call.1} parent=1 // pred_region
      _
    $region37: #{tpu_custom_call.1} parent=1 // pred_fallthru
      _
    // Predicated region
    $region38: #{tpu_custom_call.1} parent=1 // pred_check
      _
    $region39: #{tpu_custom_call.1} parent=1 // pred_check_branch
      %70 = sbr.rel (0) target = $region41
    $region40: #{tpu_custom_call.1} parent=1 // pred_region
      _
    $region41: #{tpu_custom_call.1} parent=1 // pred_fallthru
      _
    // Predicated region
    $region42: #{tpu_custom_call.1} parent=1 // pred_check
      _
    $region43: #{tpu_custom_call.1} parent=1 // pred_check_branch
      %72 = sbr.rel (0) target = $region45
    $region44: #{tpu_custom_call.1} parent=1 // pred_region
      %74 = dma.done [#allocation3], 256
    $region45: #{tpu_custom_call.1} parent=1 // pred_fallthru
      _
    // Predicated region
    $region46: #{tpu_custom_call.1} parent=1 // pred_check
      _
    $region47: #{tpu_custom_call.1} parent=1 // pred_check_branch
      %76 = sbr.rel (0) target = $region49
    $region48: #{tpu_custom_call.1} parent=1 // pred_region
      %78 = dma.done [#allocation6], 256
    $region49: #{tpu_custom_call.1} parent=1 // pred_fallthru
      _
    // Predicated region
    $region50: #{tpu_custom_call.1} parent=1 // pred_check
      _
    $region51: #{tpu_custom_call.1} parent=1 // pred_check_branch
      %80 = sbr.rel (0) target = $region53
    $region52: #{tpu_custom_call.1} parent=1 // pred_region
      %82 = dma.done [#allocation6], 256
    $region53: #{tpu_custom_call.1} parent=1 // pred_fallthru
      _
    %v83 = vld [vmem:[#allocation2] sm:$0xff]
    %v84 = vld [vmem:[#allocation2 + $0x8] sm:$0xff]
    %v85 = vld [vmem:[%s3] sm:$0xff]
    %v86 = vld [vmem:[%s3 + $0x8] sm:$0xff]
    %v87 = vld [vmem:[%s3 + $0x10] sm:$0xff]
    %v88 = vld [vmem:[%s3 + $0x18] sm:$0xff]
    %v89 = vld [vmem:[%s3 + $0x20] sm:$0xff]
    %v90 = vld [vmem:[%s3 + $0x28] sm:$0xff]
    %v91 = vld [vmem:[%s3 + $0x30] sm:$0xff]
    %v92 = vld [vmem:[%s3 + $0x38] sm:$0xff]
    %v93 = vld [vmem:[%s3 + $0x40] sm:$0xff]
    %v94 = vld [vmem:[%s3 + $0x48] sm:$0xff]
    %v95 = vld [vmem:[%s3 + $0x50] sm:$0xff]
    %v96 = vld [vmem:[%s3 + $0x58] sm:$0xff]
    %v97 = vld [vmem:[%s4] sm:$0x7]
    %v99 = vperm.slane %v97, 0
    %v100 = vperm.slane %v97, 1
    %v101 = vperm.slane %v97, 2
    %vm105 = vcmask 261120
    %v107 = vsel %vm105, %v83, 0
    %v110 = vsel %vm105, %v84, 0
    %112 = vmatpush.msra.mxu0 0.0
    %113 = vmatpush.msra.mxu0 0.0
    %114 = vmatpush.msra.mxu0 0.0
    %115 = vmatpush.msra.mxu0 0.0
    %116 = vmatpush.msra.mxu0 0.0
    %117 = vmatpush.msra.mxu0 0.0
    %118 = vmatpush.msra.mxu0 0.0
    %119 = vmatpush.msra.mxu0 0.0
    %120 = vmatpush.msra.mxu0 0.0
    %121 = vmatpush.msra.mxu0 0.0
    %122 = vmatpush.msra.mxu0 0.0
    %123 = vmatpush.msra.mxu0 0.0
    %124 = vmatpush.msra.mxu0 %v94
    %125 = vmatpush.msra.mxu0 %v91
    %126 = vmatpush.msra.mxu0 %v88
    %127 = vmatpush.msra.mxu0 %v85
    %128 = vmatmul.f32.gmra.mxu0 %v107
    %v129 = vpop.f32.mrf.mxu0
    %v130 = vadd.f32 %v99, %v129
    %131 = vmatmul.f32.gmra.mxu0 %v110
    %v132 = vpop.f32.mrf.mxu0
    %v133 = vadd.f32 %v99, %v132
    %134 = vdwg.mxu0
    %135 = vmatpush.msra.mxu0 0.0
    %136 = vmatpush.msra.mxu0 0.0
    %137 = vmatpush.msra.mxu0 0.0
    %138 = vmatpush.msra.mxu0 0.0
    %139 = vmatpush.msra.mxu0 0.0
    %140 = vmatpush.msra.mxu0 0.0
    %141 = vmatpush.msra.mxu0 0.0
    %142 = vmatpush.msra.mxu0 0.0
    %143 = vmatpush.msra.mxu0 0.0
    %144 = vmatpush.msra.mxu0 0.0
    %145 = vmatpush.msra.mxu0 0.0
    %146 = vmatpush.msra.mxu0 0.0
    %147 = vmatpush.msra.mxu0 %v95
    %148 = vmatpush.msra.mxu0 %v92
    %149 = vmatpush.msra.mxu0 %v89
    %150 = vmatpush.msra.mxu0 %v86
    %151 = vmatmul.f32.gmra.mxu0 %v107
    %v152 = vpop.f32.mrf.mxu0
    %v153 = vadd.f32 %v100, %v152
    %154 = vmatmul.f32.gmra.mxu0 %v110
    %v155 = vpop.f32.mrf.mxu0
    %v156 = vadd.f32 %v100, %v155
    %157 = vdwg.mxu0
    %158 = vmatpush.msra.mxu0 0.0
    %159 = vmatpush.msra.mxu0 0.0
    %160 = vmatpush.msra.mxu0 0.0
    %161 = vmatpush.msra.mxu0 0.0
    %162 = vmatpush.msra.mxu0 0.0
    %163 = vmatpush.msra.mxu0 0.0
    %164 = vmatpush.msra.mxu0 0.0
    %165 = vmatpush.msra.mxu0 0.0
    %166 = vmatpush.msra.mxu0 0.0
    %167 = vmatpush.msra.mxu0 0.0
    %168 = vmatpush.msra.mxu0 0.0
    %169 = vmatpush.msra.mxu0 0.0
    %170 = vmatpush.msra.mxu0 %v96
    %171 = vmatpush.msra.mxu0 %v93
    %172 = vmatpush.msra.mxu0 %v90
    %173 = vmatpush.msra.mxu0 %v87
    %174 = vmatmul.f32.gmra.mxu0 %v107
    %v175 = vpop.f32.mrf.mxu0
    %v176 = vadd.f32 %v101, %v175
    %177 = vmatmul.f32.gmra.mxu0 %v110
    %v178 = vpop.f32.mrf.mxu0
    %v179 = vadd.f32 %v101, %v178
    %180 = vdwg.mxu0
    %v181 = vlaneseq
    %v182 = vand.u32 %v181, 127
    %vm183 = vcmp.ge.s32.totalorder %v182, 0
    %vm184 = vcmp.lt.s32.totalorder %v182, 8
    %vm185 = vmand %vm183, %vm184
    %v186 = vsel %vm185, %v130, 0.0
    %v187 = vsel %vm185, %v133, 0.0
    %188 = vmatpush.xpose.msra.mxu0 0.0
    %189 = vmatpush.xpose.msra.mxu0 0.0
    %190 = vmatpush.xpose.msra.mxu0 0.0
    %191 = vmatpush.xpose.msra.mxu0 0.0
    %192 = vmatpush.xpose.msra.mxu0 0.0
    %193 = vmatpush.xpose.msra.mxu0 0.0
    %194 = vmatpush.xpose.msra.mxu0 0.0
    %195 = vmatpush.xpose.msra.mxu0 0.0
    %196 = vmatpush.xpose.msra.mxu0 0.0
    %197 = vmatpush.xpose.msra.mxu0 0.0
    %198 = vmatpush.xpose.msra.mxu0 0.0
    %199 = vmatpush.xpose.msra.mxu0 0.0
    %200 = vmatpush.xpose.msra.mxu0 0.0
    %201 = vmatpush.xpose.msra.mxu0 0.0
    %202 = vmatpush.xpose.msra.mxu0 0.0
    %203 = vmatpush.xpose.msra.mxu0 %v153
    %204 = vmatmul.f32.gmra.mxu0 %v186
    %v205 = vpop.f32.mrf.mxu0
    %v206 = vadd.f32 0.0, %v205
    %207 = vdwg.mxu0
    %208 = vmatpush.xpose.msra.mxu0 0.0
    %209 = vmatpush.xpose.msra.mxu0 0.0
    %210 = vmatpush.xpose.msra.mxu0 0.0
    %211 = vmatpush.xpose.msra.mxu0 0.0
    %212 = vmatpush.xpose.msra.mxu0 0.0
    %213 = vmatpush.xpose.msra.mxu0 0.0
    %214 = vmatpush.xpose.msra.mxu0 0.0
    %215 = vmatpush.xpose.msra.mxu0 0.0
    %216 = vmatpush.xpose.msra.mxu0 0.0
    %217 = vmatpush.xpose.msra.mxu0 0.0
    %218 = vmatpush.xpose.msra.mxu0 0.0
    %219 = vmatpush.xpose.msra.mxu0 0.0
    %220 = vmatpush.xpose.msra.mxu0 0.0
    %221 = vmatpush.xpose.msra.mxu0 0.0
    %222 = vmatpush.xpose.msra.mxu0 0.0
    %223 = vmatpush.xpose.msra.mxu0 %v156
    %224 = vmatmul.f32.gmra.mxu0 %v187
    %v225 = vpop.f32.mrf.mxu0
    %v226 = vadd.f32 0.0, %v225
    %227 = vdwg.mxu0
    %v228 = vmul.f32 %v206, 0.35355338
    %v229 = vmul.f32 %v226, 0.35355338
    %vm230 = vcmask 64512
    %v231 = vsel %vm230, %v228, -inf
    %232 = vmax.xlane.f32.xlu0 %v231
    %v233 = vpop.xlane.xlu0 %232
    %v234 = vsel %vm230, %v229, -inf
    %235 = vmax.xlane.f32.xlu0 %v234
    %v236 = vpop.xlane.xlu0 %235
    %v237 = vsub.f32 %v228, %v233
    %v238 = vsub.f32 %v229, %v236
    %v239 = vmul.f32 %v237, 1.442695
    %v240 = vpow.pop %v239
    %v241 = vmul.f32 %v238, 1.442695
    %v242 = vpow.pop %v241
    %v243 = vsel %vm230, %v240, 0.0
    %244 = vadd.xlane.f32.xlu0 %v243
    %v245 = vpop.xlane.xlu0 %244
    %v246 = vsel %vm230, %v242, 0.0
    %247 = vadd.xlane.f32.xlu0 %v246
    %v248 = vpop.xlane.xlu0 %247
    %v249 = vrcp.pop %v245
    %v250 = vmul.f32 %v245, %v249
    %v251 = vsub.f32 1.0, %v250
    %v252 = vmul.f32 %v249, %v251
    %v253 = vadd.f32 %v249, %v252
    %vm254 = vweird.f32 %v245
    %vm255 = vweird.f32 %v249
    %vm256 = vmor %vm254, %vm255
    %v257 = vsel %vm256, %v249, %v253
    %v258 = vand.u32 2147483647, %v245
    %vm259 = vcmp.eq.f32.partialorder %v258, 8.507059e+37
    %v260 = vand.u32 %v245, 2147483648
    %v261 = vor.u32 1.1754944e-38, %v260
    %v262 = vsel %vm259, %v261, %v257
    %v263 = vmul.f32 %v240, %v262
    %v264 = vrcp.pop %v248
    %v265 = vmul.f32 %v248, %v264
    %v266 = vsub.f32 1.0, %v265
    %v267 = vmul.f32 %v264, %v266
    %v268 = vadd.f32 %v264, %v267
    %vm269 = vweird.f32 %v248
    %vm270 = vweird.f32 %v264
    %vm271 = vmor %vm269, %vm270
    %v272 = vsel %vm271, %v264, %v268
    %v273 = vand.u32 2147483647, %v248
    %vm274 = vcmp.eq.f32.partialorder %v273, 8.507059e+37
    %v275 = vand.u32 %v248, 2147483648
    %v276 = vor.u32 1.1754944e-38, %v275
    %v277 = vsel %vm274, %v276, %v272
    %v278 = vmul.f32 %v242, %v277
    %v279 = vsel %vm185, %v176, 0.0
    %v280 = vsel %vm185, %v179, 0.0
    %vm281 = vcmp.ge.s32.totalorder %v182, 8
    %vm282 = vcmp.lt.s32.totalorder %v182, 16
    %vm283 = vmand %vm281, %vm282
    %v284 = vsel %vm283, %v130, 0.0
    %v285 = vsel %vm283, %v133, 0.0
    %286 = vmatpush.xpose.msra.mxu0 0.0
    %287 = vmatpush.xpose.msra.mxu0 0.0
    %288 = vmatpush.xpose.msra.mxu0 0.0
    %289 = vmatpush.xpose.msra.mxu0 0.0
    %290 = vmatpush.xpose.msra.mxu0 0.0
    %291 = vmatpush.xpose.msra.mxu0 0.0
    %292 = vmatpush.xpose.msra.mxu0 0.0
    %293 = vmatpush.xpose.msra.mxu0 0.0
    %294 = vmatpush.xpose.msra.mxu0 0.0
    %295 = vmatpush.xpose.msra.mxu0 0.0
    %296 = vmatpush.xpose.msra.mxu0 0.0
    %297 = vmatpush.xpose.msra.mxu0 0.0
    %298 = vmatpush.xpose.msra.mxu0 0.0
    %299 = vmatpush.xpose.msra.mxu0 0.0
    %300 = vmatpush.xpose.msra.mxu0 0.0
    %301 = vmatpush.xpose.msra.mxu0 %v153
    %302 = vmatmul.f32.gmra.mxu0 %v284
    %v303 = vpop.f32.mrf.mxu0
    %v304 = vadd.f32 0.0, %v303
    %305 = vdwg.mxu0
    %306 = vmatpush.xpose.msra.mxu0 0.0
    %307 = vmatpush.xpose.msra.mxu0 0.0
    %308 = vmatpush.xpose.msra.mxu0 0.0
    %309 = vmatpush.xpose.msra.mxu0 0.0
    %310 = vmatpush.xpose.msra.mxu0 0.0
    %311 = vmatpush.xpose.msra.mxu0 0.0
    %312 = vmatpush.xpose.msra.mxu0 0.0
    %313 = vmatpush.xpose.msra.mxu0 0.0
    %314 = vmatpush.xpose.msra.mxu0 0.0
    %315 = vmatpush.xpose.msra.mxu0 0.0
    %316 = vmatpush.xpose.msra.mxu0 0.0
    %317 = vmatpush.xpose.msra.mxu0 0.0
    %318 = vmatpush.xpose.msra.mxu0 0.0
    %319 = vmatpush.xpose.msra.mxu0 0.0
    %320 = vmatpush.xpose.msra.mxu0 0.0
    %321 = vmatpush.xpose.msra.mxu0 %v156
    %322 = vmatmul.f32.gmra.mxu0 %v285
    %v323 = vpop.f32.mrf.mxu0
    %v324 = vadd.f32 0.0, %v323
    %325 = vdwg.mxu0
    %v326 = vmul.f32 %v304, 0.35355338
    %v327 = vmul.f32 %v324, 0.35355338
    %v328 = vsel %vm230, %v326, -inf
    %329 = vmax.xlane.f32.xlu0 %v328
    %v330 = vpop.xlane.xlu0 %329
    %v331 = vsel %vm230, %v327, -inf
    %332 = vmax.xlane.f32.xlu0 %v331
    %v333 = vpop.xlane.xlu0 %332
    %v334 = vsub.f32 %v326, %v330
    %v335 = vsub.f32 %v327, %v333
    %v336 = vmul.f32 %v334, 1.442695
    %v337 = vpow.pop %v336
    %v338 = vmul.f32 %v335, 1.442695
    %v339 = vpow.pop %v338
    %v340 = vsel %vm230, %v337, 0.0
    %341 = vadd.xlane.f32.xlu0 %v340
    %v342 = vpop.xlane.xlu0 %341
    %v343 = vsel %vm230, %v339, 0.0
    %344 = vadd.xlane.f32.xlu0 %v343
    %v345 = vpop.xlane.xlu0 %344
    %v346 = vrcp.pop %v342
    %v347 = vmul.f32 %v342, %v346
    %v348 = vsub.f32 1.0, %v347
    %v349 = vmul.f32 %v346, %v348
    %v350 = vadd.f32 %v346, %v349
    %vm351 = vweird.f32 %v342
    %vm352 = vweird.f32 %v346
    %vm353 = vmor %vm351, %vm352
    %v354 = vsel %vm353, %v346, %v350
    %v355 = vand.u32 2147483647, %v342
    %vm356 = vcmp.eq.f32.partialorder %v355, 8.507059e+37
    %v357 = vand.u32 %v342, 2147483648
    %v358 = vor.u32 1.1754944e-38, %v357
    %v359 = vsel %vm356, %v358, %v354
    %v360 = vmul.f32 %v337, %v359
    %v361 = vrcp.pop %v345
    %v362 = vmul.f32 %v345, %v361
    %v363 = vsub.f32 1.0, %v362
    %v364 = vmul.f32 %v361, %v363
    %v365 = vadd.f32 %v361, %v364
    %vm366 = vweird.f32 %v345
    %vm367 = vweird.f32 %v361
    %vm368 = vmor %vm366, %vm367
    %v369 = vsel %vm368, %v361, %v365
    %v370 = vand.u32 2147483647, %v345
    %vm371 = vcmp.eq.f32.partialorder %v370, 8.507059e+37
    %v372 = vand.u32 %v345, 2147483648
    %v373 = vor.u32 1.1754944e-38, %v372
    %v374 = vsel %vm371, %v373, %v369
    %v375 = vmul.f32 %v339, %v374
    %v376 = vsel %vm283, %v176, 0.0
    %v377 = vsel %vm283, %v179, 0.0
    %v379 = vsel %vm230, %v360, 0
    %381 = vmatpush.msra.mxu0 0.0
    %382 = vmatpush.msra.mxu0 0.0
    %383 = vmatpush.msra.mxu0 0.0
    %384 = vmatpush.msra.mxu0 0.0
    %385 = vmatpush.msra.mxu0 0.0
    %386 = vmatpush.msra.mxu0 0.0
    %387 = vmatpush.msra.mxu0 0.0
    %388 = vmatpush.msra.mxu0 0.0
    %389 = vmatpush.msra.mxu0 0.0
    %390 = vmatpush.msra.mxu0 0.0
    %391 = vmatpush.msra.mxu0 0.0
    %392 = vmatpush.msra.mxu0 0.0
    %393 = vmatpush.msra.mxu0 0.0
    %394 = vmatpush.msra.mxu0 0.0
    %395 = vmatpush.msra.mxu0 0.0
    %396 = vmatpush.msra.mxu0 %v376
    %397 = vmatmul.f32.gmra.mxu0 %v379
    %v398 = vpop.f32.mrf.mxu0
    %v399 = vadd.f32 0.0, %v398
    %400 = vdwg.mxu0
    %v402 = vsel %vm230, %v375, 0
    %404 = vmatpush.msra.mxu0 0.0
    %405 = vmatpush.msra.mxu0 0.0
    %406 = vmatpush.msra.mxu0 0.0
    %407 = vmatpush.msra.mxu0 0.0
    %408 = vmatpush.msra.mxu0 0.0
    %409 = vmatpush.msra.mxu0 0.0
    %410 = vmatpush.msra.mxu0 0.0
    %411 = vmatpush.msra.mxu0 0.0
    %412 = vmatpush.msra.mxu0 0.0
    %413 = vmatpush.msra.mxu0 0.0
    %414 = vmatpush.msra.mxu0 0.0
    %415 = vmatpush.msra.mxu0 0.0
    %416 = vmatpush.msra.mxu0 0.0
    %417 = vmatpush.msra.mxu0 0.0
    %418 = vmatpush.msra.mxu0 0.0
    %419 = vmatpush.msra.mxu0 %v377
    %420 = vmatmul.f32.gmra.mxu0 %v402
    %v421 = vpop.f32.mrf.mxu0
    %v422 = vadd.f32 0.0, %v421
    %423 = vdwg.mxu0
    %v425 = vsel %vm230, %v263, 0
    %427 = vmatpush.msra.mxu0 0.0
    %428 = vmatpush.msra.mxu0 0.0
    %429 = vmatpush.msra.mxu0 0.0
    %430 = vmatpush.msra.mxu0 0.0
    %431 = vmatpush.msra.mxu0 0.0
    %432 = vmatpush.msra.mxu0 0.0
    %433 = vmatpush.msra.mxu0 0.0
    %434 = vmatpush.msra.mxu0 0.0
    %435 = vmatpush.msra.mxu0 0.0
    %436 = vmatpush.msra.mxu0 0.0
    %437 = vmatpush.msra.mxu0 0.0
    %438 = vmatpush.msra.mxu0 0.0
    %439 = vmatpush.msra.mxu0 0.0
    %440 = vmatpush.msra.mxu0 0.0
    %441 = vmatpush.msra.mxu0 0.0
    %442 = vmatpush.msra.mxu0 %v279
    %443 = vmatmul.f32.gmra.mxu0 %v425
    %v444 = vpop.f32.mrf.mxu0
    %v445 = vadd.f32 %v399, %v444
    %446 = vdwg.mxu0
    %v448 = vsel %vm230, %v278, 0
    %450 = vmatpush.msra.mxu0 0.0
    %451 = vmatpush.msra.mxu0 0.0
    %452 = vmatpush.msra.mxu0 0.0
    %453 = vmatpush.msra.mxu0 0.0
    %454 = vmatpush.msra.mxu0 0.0
    %455 = vmatpush.msra.mxu0 0.0
    %456 = vmatpush.msra.mxu0 0.0
    %457 = vmatpush.msra.mxu0 0.0
    %458 = vmatpush.msra.mxu0 0.0
    %459 = vmatpush.msra.mxu0 0.0
    %460 = vmatpush.msra.mxu0 0.0
    %461 = vmatpush.msra.mxu0 0.0
    %462 = vmatpush.msra.mxu0 0.0
    %463 = vmatpush.msra.mxu0 0.0
    %464 = vmatpush.msra.mxu0 0.0
    %465 = vmatpush.msra.mxu0 %v280
    %466 = vmatmul.f32.gmra.mxu0 %v448
    %v467 = vpop.f32.mrf.mxu0
    %v468 = vadd.f32 %v422, %v467
    %469 = vdwg.mxu0
    %vm470 = vcmp.ge.s32.totalorder %v182, 16
    %vm471 = vcmp.lt.s32.totalorder %v182, 24
    %vm472 = vmand %vm470, %vm471
    %v473 = vsel %vm472, %v130, 0.0
    %v474 = vsel %vm472, %v133, 0.0
    %475 = vmatpush.xpose.msra.mxu0 0.0
    %476 = vmatpush.xpose.msra.mxu0 0.0
    %477 = vmatpush.xpose.msra.mxu0 0.0
    %478 = vmatpush.xpose.msra.mxu0 0.0
    %479 = vmatpush.xpose.msra.mxu0 0.0
    %480 = vmatpush.xpose.msra.mxu0 0.0
    %481 = vmatpush.xpose.msra.mxu0 0.0
    %482 = vmatpush.xpose.msra.mxu0 0.0
    %483 = vmatpush.xpose.msra.mxu0 0.0
    %484 = vmatpush.xpose.msra.mxu0 0.0
    %485 = vmatpush.xpose.msra.mxu0 0.0
    %486 = vmatpush.xpose.msra.mxu0 0.0
    %487 = vmatpush.xpose.msra.mxu0 0.0
    %488 = vmatpush.xpose.msra.mxu0 0.0
    %489 = vmatpush.xpose.msra.mxu0 0.0
    %490 = vmatpush.xpose.msra.mxu0 %v153
    %491 = vmatmul.f32.gmra.mxu0 %v473
    %v492 = vpop.f32.mrf.mxu0
    %v493 = vadd.f32 0.0, %v492
    %494 = vdwg.mxu0
    %495 = vmatpush.xpose.msra.mxu0 0.0
    %496 = vmatpush.xpose.msra.mxu0 0.0
    %497 = vmatpush.xpose.msra.mxu0 0.0
    %498 = vmatpush.xpose.msra.mxu0 0.0
    %499 = vmatpush.xpose.msra.mxu0 0.0
    %500 = vmatpush.xpose.msra.mxu0 0.0
    %501 = vmatpush.xpose.msra.mxu0 0.0
    %502 = vmatpush.xpose.msra.mxu0 0.0
    %503 = vmatpush.xpose.msra.mxu0 0.0
    %504 = vmatpush.xpose.msra.mxu0 0.0
    %505 = vmatpush.xpose.msra.mxu0 0.0
    %506 = vmatpush.xpose.msra.mxu0 0.0
    %507 = vmatpush.xpose.msra.mxu0 0.0
    %508 = vmatpush.xpose.msra.mxu0 0.0
    %509 = vmatpush.xpose.msra.mxu0 0.0
    %510 = vmatpush.xpose.msra.mxu0 %v156
    %511 = vmatmul.f32.gmra.mxu0 %v474
    %v512 = vpop.f32.mrf.mxu0
    %v513 = vadd.f32 0.0, %v512
    %514 = vdwg.mxu0
    %v515 = vmul.f32 %v493, 0.35355338
    %v516 = vmul.f32 %v513, 0.35355338
    %v517 = vsel %vm230, %v515, -inf
    %518 = vmax.xlane.f32.xlu0 %v517
    %v519 = vpop.xlane.xlu0 %518
    %v520 = vsel %vm230, %v516, -inf
    %521 = vmax.xlane.f32.xlu0 %v520
    %v522 = vpop.xlane.xlu0 %521
    %v523 = vsub.f32 %v515, %v519
    %v524 = vsub.f32 %v516, %v522
    %v525 = vmul.f32 %v523, 1.442695
    %v526 = vpow.pop %v525
    %v527 = vmul.f32 %v524, 1.442695
    %v528 = vpow.pop %v527
    %v529 = vsel %vm230, %v526, 0.0
    %530 = vadd.xlane.f32.xlu0 %v529
    %v531 = vpop.xlane.xlu0 %530
    %v532 = vsel %vm230, %v528, 0.0
    %533 = vadd.xlane.f32.xlu0 %v532
    %v534 = vpop.xlane.xlu0 %533
    %v535 = vrcp.pop %v531
    %v536 = vmul.f32 %v531, %v535
    %v537 = vsub.f32 1.0, %v536
    %v538 = vmul.f32 %v535, %v537
    %v539 = vadd.f32 %v535, %v538
    %vm540 = vweird.f32 %v531
    %vm541 = vweird.f32 %v535
    %vm542 = vmor %vm540, %vm541
    %v543 = vsel %vm542, %v535, %v539
    %v544 = vand.u32 2147483647, %v531
    %vm545 = vcmp.eq.f32.partialorder %v544, 8.507059e+37
    %v546 = vand.u32 %v531, 2147483648
    %v547 = vor.u32 1.1754944e-38, %v546
    %v548 = vsel %vm545, %v547, %v543
    %v549 = vmul.f32 %v526, %v548
    %v550 = vrcp.pop %v534
    %v551 = vmul.f32 %v534, %v550
    %v552 = vsub.f32 1.0, %v551
    %v553 = vmul.f32 %v550, %v552
    %v554 = vadd.f32 %v550, %v553
    %vm555 = vweird.f32 %v534
    %vm556 = vweird.f32 %v550
    %vm557 = vmor %vm555, %vm556
    %v558 = vsel %vm557, %v550, %v554
    %v559 = vand.u32 2147483647, %v534
    %vm560 = vcmp.eq.f32.partialorder %v559, 8.507059e+37
    %v561 = vand.u32 %v534, 2147483648
    %v562 = vor.u32 1.1754944e-38, %v561
    %v563 = vsel %vm560, %v562, %v558
    %v564 = vmul.f32 %v528, %v563
    %v565 = vsel %vm472, %v176, 0.0
    %v566 = vsel %vm472, %v179, 0.0
    %v568 = vsel %vm230, %v549, 0
    %570 = vmatpush.msra.mxu0 0.0
    %571 = vmatpush.msra.mxu0 0.0
    %572 = vmatpush.msra.mxu0 0.0
    %573 = vmatpush.msra.mxu0 0.0
    %574 = vmatpush.msra.mxu0 0.0
    %575 = vmatpush.msra.mxu0 0.0
    %576 = vmatpush.msra.mxu0 0.0
    %577 = vmatpush.msra.mxu0 0.0
    %578 = vmatpush.msra.mxu0 0.0
    %579 = vmatpush.msra.mxu0 0.0
    %580 = vmatpush.msra.mxu0 0.0
    %581 = vmatpush.msra.mxu0 0.0
    %582 = vmatpush.msra.mxu0 0.0
    %583 = vmatpush.msra.mxu0 0.0
    %584 = vmatpush.msra.mxu0 0.0
    %585 = vmatpush.msra.mxu0 %v565
    %586 = vmatmul.f32.gmra.mxu0 %v568
    %v587 = vpop.f32.mrf.mxu0
    %v588 = vadd.f32 0.0, %v587
    %589 = vdwg.mxu0
    %v591 = vsel %vm230, %v564, 0
    %593 = vmatpush.msra.mxu0 0.0
    %594 = vmatpush.msra.mxu0 0.0
    %595 = vmatpush.msra.mxu0 0.0
    %596 = vmatpush.msra.mxu0 0.0
    %597 = vmatpush.msra.mxu0 0.0
    %598 = vmatpush.msra.mxu0 0.0
    %599 = vmatpush.msra.mxu0 0.0
    %600 = vmatpush.msra.mxu0 0.0
    %601 = vmatpush.msra.mxu0 0.0
    %602 = vmatpush.msra.mxu0 0.0
    %603 = vmatpush.msra.mxu0 0.0
    %604 = vmatpush.msra.mxu0 0.0
    %605 = vmatpush.msra.mxu0 0.0
    %606 = vmatpush.msra.mxu0 0.0
    %607 = vmatpush.msra.mxu0 0.0
    %608 = vmatpush.msra.mxu0 %v566
    %609 = vmatmul.f32.gmra.mxu0 %v591
    %v610 = vpop.f32.mrf.mxu0
    %v611 = vadd.f32 0.0, %v610
    %612 = vdwg.mxu0
    %v613 = vadd.f32 %v445, %v588
    %v614 = vadd.f32 %v468, %v611
    %vm615 = vcmp.ge.s32.totalorder %v182, 24
    %vm616 = vcmp.lt.s32.totalorder %v182, 32
    %vm617 = vmand %vm615, %vm616
    %v618 = vsel %vm617, %v130, 0.0
    %v619 = vsel %vm617, %v133, 0.0
    %620 = vmatpush.xpose.msra.mxu0 0.0
    %621 = vmatpush.xpose.msra.mxu0 0.0
    %622 = vmatpush.xpose.msra.mxu0 0.0
    %623 = vmatpush.xpose.msra.mxu0 0.0
    %624 = vmatpush.xpose.msra.mxu0 0.0
    %625 = vmatpush.xpose.msra.mxu0 0.0
    %626 = vmatpush.xpose.msra.mxu0 0.0
    %627 = vmatpush.xpose.msra.mxu0 0.0
    %628 = vmatpush.xpose.msra.mxu0 0.0
    %629 = vmatpush.xpose.msra.mxu0 0.0
    %630 = vmatpush.xpose.msra.mxu0 0.0
    %631 = vmatpush.xpose.msra.mxu0 0.0
    %632 = vmatpush.xpose.msra.mxu0 0.0
    %633 = vmatpush.xpose.msra.mxu0 0.0
    %634 = vmatpush.xpose.msra.mxu0 0.0
    %635 = vmatpush.xpose.msra.mxu0 %v153
    %636 = vmatmul.f32.gmra.mxu0 %v618
    %v637 = vpop.f32.mrf.mxu0
    %v638 = vadd.f32 0.0, %v637
    %639 = vdwg.mxu0
    %640 = vmatpush.xpose.msra.mxu0 0.0
    %641 = vmatpush.xpose.msra.mxu0 0.0
    %642 = vmatpush.xpose.msra.mxu0 0.0
    %643 = vmatpush.xpose.msra.mxu0 0.0
    %644 = vmatpush.xpose.msra.mxu0 0.0
    %645 = vmatpush.xpose.msra.mxu0 0.0
    %646 = vmatpush.xpose.msra.mxu0 0.0
    %647 = vmatpush.xpose.msra.mxu0 0.0
    %648 = vmatpush.xpose.msra.mxu0 0.0
    %649 = vmatpush.xpose.msra.mxu0 0.0
    %650 = vmatpush.xpose.msra.mxu0 0.0
    %651 = vmatpush.xpose.msra.mxu0 0.0
    %652 = vmatpush.xpose.msra.mxu0 0.0
    %653 = vmatpush.xpose.msra.mxu0 0.0
    %654 = vmatpush.xpose.msra.mxu0 0.0
    %655 = vmatpush.xpose.msra.mxu0 %v156
    %656 = vmatmul.f32.gmra.mxu0 %v619
    %v657 = vpop.f32.mrf.mxu0
    %v658 = vadd.f32 0.0, %v657
    %659 = vdwg.mxu0
    %v660 = vmul.f32 %v638, 0.35355338
    %v661 = vmul.f32 %v658, 0.35355338
    %v662 = vsel %vm230, %v660, -inf
    %663 = vmax.xlane.f32.xlu0 %v662
    %v664 = vpop.xlane.xlu0 %663
    %v665 = vsel %vm230, %v661, -inf
    %666 = vmax.xlane.f32.xlu0 %v665
    %v667 = vpop.xlane.xlu0 %666
    %v668 = vsub.f32 %v660, %v664
    %v669 = vsub.f32 %v661, %v667
    %v670 = vmul.f32 %v668, 1.442695
    %v671 = vpow.pop %v670
    %v672 = vmul.f32 %v669, 1.442695
    %v673 = vpow.pop %v672
    %v674 = vsel %vm230, %v671, 0.0
    %675 = vadd.xlane.f32.xlu0 %v674
    %v676 = vpop.xlane.xlu0 %675
    %v677 = vsel %vm230, %v673, 0.0
    %678 = vadd.xlane.f32.xlu0 %v677
    %v679 = vpop.xlane.xlu0 %678
    %v680 = vrcp.pop %v676
    %v681 = vmul.f32 %v676, %v680
    %v682 = vsub.f32 1.0, %v681
    %v683 = vmul.f32 %v680, %v682
    %v684 = vadd.f32 %v680, %v683
    %vm685 = vweird.f32 %v676
    %vm686 = vweird.f32 %v680
    %vm687 = vmor %vm685, %vm686
    %v688 = vsel %vm687, %v680, %v684
    %v689 = vand.u32 2147483647, %v676
    %vm690 = vcmp.eq.f32.partialorder %v689, 8.507059e+37
    %v691 = vand.u32 %v676, 2147483648
    %v692 = vor.u32 1.1754944e-38, %v691
    %v693 = vsel %vm690, %v692, %v688
    %v694 = vmul.f32 %v671, %v693
    %v695 = vrcp.pop %v679
    %v696 = vmul.f32 %v679, %v695
    %v697 = vsub.f32 1.0, %v696
    %v698 = vmul.f32 %v695, %v697
    %v699 = vadd.f32 %v695, %v698
    %vm700 = vweird.f32 %v679
    %vm701 = vweird.f32 %v695
    %vm702 = vmor %vm700, %vm701
    %v703 = vsel %vm702, %v695, %v699
    %v704 = vand.u32 2147483647, %v679
    %vm705 = vcmp.eq.f32.partialorder %v704, 8.507059e+37
    %v706 = vand.u32 %v679, 2147483648
    %v707 = vor.u32 1.1754944e-38, %v706
    %v708 = vsel %vm705, %v707, %v703
    %v709 = vmul.f32 %v673, %v708
    %v710 = vsel %vm617, %v176, 0.0
    %v711 = vsel %vm617, %v179, 0.0
    %v713 = vsel %vm230, %v694, 0
    %715 = vmatpush.msra.mxu0 0.0
    %716 = vmatpush.msra.mxu0 0.0
    %717 = vmatpush.msra.mxu0 0.0
    %718 = vmatpush.msra.mxu0 0.0
    %719 = vmatpush.msra.mxu0 0.0
    %720 = vmatpush.msra.mxu0 0.0
    %721 = vmatpush.msra.mxu0 0.0
    %722 = vmatpush.msra.mxu0 0.0
    %723 = vmatpush.msra.mxu0 0.0
    %724 = vmatpush.msra.mxu0 0.0
    %725 = vmatpush.msra.mxu0 0.0
    %726 = vmatpush.msra.mxu0 0.0
    %727 = vmatpush.msra.mxu0 0.0
    %728 = vmatpush.msra.mxu0 0.0
    %729 = vmatpush.msra.mxu0 0.0
    %730 = vmatpush.msra.mxu0 %v710
    %731 = vmatmul.f32.gmra.mxu0 %v713
    %v732 = vpop.f32.mrf.mxu0
    %v733 = vadd.f32 0.0, %v732
    %734 = vdwg.mxu0
    %v736 = vsel %vm230, %v709, 0
    %738 = vmatpush.msra.mxu0 0.0
    %739 = vmatpush.msra.mxu0 0.0
    %740 = vmatpush.msra.mxu0 0.0
    %741 = vmatpush.msra.mxu0 0.0
    %742 = vmatpush.msra.mxu0 0.0
    %743 = vmatpush.msra.mxu0 0.0
    %744 = vmatpush.msra.mxu0 0.0
    %745 = vmatpush.msra.mxu0 0.0
    %746 = vmatpush.msra.mxu0 0.0
    %747 = vmatpush.msra.mxu0 0.0
    %748 = vmatpush.msra.mxu0 0.0
    %749 = vmatpush.msra.mxu0 0.0
    %750 = vmatpush.msra.mxu0 0.0
    %751 = vmatpush.msra.mxu0 0.0
    %752 = vmatpush.msra.mxu0 0.0
    %753 = vmatpush.msra.mxu0 %v711
    %754 = vmatmul.f32.gmra.mxu0 %v736
    %v755 = vpop.f32.mrf.mxu0
    %v756 = vadd.f32 0.0, %v755
    %757 = vdwg.mxu0
    %v758 = vadd.f32 %v613, %v733
    %v759 = vadd.f32 %v614, %v756
    %v760 = vld [vmem:[%s5] sm:$0xff]
    %v761 = vld [vmem:[%s5 + $0x8] sm:$0xff]
    %v762 = vld [vmem:[%s5 + $0x10] sm:$0xff]
    %v763 = vld [vmem:[%s5 + $0x18] sm:$0xff]
    %v764 = vld [vmem:[%s5 + $0x20] sm:$0xff]
    %v765 = vld [vmem:[%s5 + $0x28] sm:$0xff]
    %v766 = vld [vmem:[%s5 + $0x30] sm:$0xff]
    %v767 = vld [vmem:[%s5 + $0x38] sm:$0xff]
    %v768 = vld [vmem:[%s5 + $0x40] sm:$0xff]
    %v769 = vld [vmem:[%s5 + $0x48] sm:$0xff]
    %v770 = vld [vmem:[%s5 + $0x50] sm:$0xff]
    %v771 = vld [vmem:[%s5 + $0x58] sm:$0xff]
    %v772 = vld [vmem:[%s5 + $0x60] sm:$0xff]
    %v773 = vld [vmem:[%s5 + $0x68] sm:$0xff]
    %v774 = vld [vmem:[%s5 + $0x70] sm:$0xff]
    %v775 = vld [vmem:[%s5 + $0x78] sm:$0xff]
    %v776 = vld [vmem:[%s6] sm:$0x1]
    %v778 = vperm.slane %v776, 0
    %780 = vmatpush.msra.mxu0 %v775
    %781 = vmatpush.msra.mxu0 %v774
    %782 = vmatpush.msra.mxu0 %v773
    %783 = vmatpush.msra.mxu0 %v772
    %784 = vmatpush.msra.mxu0 %v771
    %785 = vmatpush.msra.mxu0 %v770
    %786 = vmatpush.msra.mxu0 %v769
    %787 = vmatpush.msra.mxu0 %v768
    %788 = vmatpush.msra.mxu0 %v767
    %789 = vmatpush.msra.mxu0 %v766
    %790 = vmatpush.msra.mxu0 %v765
    %791 = vmatpush.msra.mxu0 %v764
    %792 = vmatpush.msra.mxu0 %v763
    %793 = vmatpush.msra.mxu0 %v762
    %794 = vmatpush.msra.mxu0 %v761
    %795 = vmatpush.msra.mxu0 %v760
    %796 = vmatmul.f32.gmra.mxu0 %v758
    %v797 = vpop.f32.mrf.mxu0
    %v798 = vadd.f32 %v778, %v797
    %799 = vmatmul.f32.gmra.mxu0 %v759
    %v800 = vpop.f32.mrf.mxu0
    %v801 = vadd.f32 %v778, %v800
    %802 = vdwg.mxu0
    %v803 = vld [vmem:[#allocation5] sm:$0xff]
    %v804 = vld [vmem:[#allocation5 + $0x8] sm:$0xff]
    %v805 = vld [vmem:[%s7] sm:$0xff]
    %v806 = vld [vmem:[%s7 + $0x8] sm:$0xff]
    %v807 = vld [vmem:[%s7 + $0x10] sm:$0xff]
    %v808 = vld [vmem:[%s7 + $0x18] sm:$0xff]
    %v809 = vld [vmem:[%s8] sm:$0xff]
    %v810 = vld [vmem:[%s8 + $0x8] sm:$0xff]
    %v811 = vld [vmem:[%s8 + $0x10] sm:$0xff]
    %v812 = vld [vmem:[%s8 + $0x18] sm:$0xff]
    %v814 = vsel %vm105, %v798, 0
    %v817 = vsel %vm105, %v801, 0
    %819 = vmatpush.msra.mxu0 0.0
    %820 = vmatpush.msra.mxu0 0.0
    %821 = vmatpush.msra.mxu0 0.0
    %822 = vmatpush.msra.mxu0 0.0
    %823 = vmatpush.msra.mxu0 0.0
    %824 = vmatpush.msra.mxu0 0.0
    %825 = vmatpush.msra.mxu0 0.0
    %826 = vmatpush.msra.mxu0 0.0
    %827 = vmatpush.msra.mxu0 0.0
    %828 = vmatpush.msra.mxu0 0.0
    %829 = vmatpush.msra.mxu0 0.0
    %830 = vmatpush.msra.mxu0 0.0
    %831 = vmatpush.msra.mxu0 %v812
    %832 = vmatpush.msra.mxu0 %v811
    %833 = vmatpush.msra.mxu0 %v810
    %834 = vmatpush.msra.mxu0 %v809
    %835 = vmatmul.f32.gmra.mxu0 %v814
    %v836 = vpop.f32.mrf.mxu0
    %v837 = vadd.f32 0.0, %v836
    %838 = vmatmul.f32.gmra.mxu0 %v817
    %v839 = vpop.f32.mrf.mxu0
    %v840 = vadd.f32 0.0, %v839
    %841 = vdwg.mxu0
    %v843 = vsel %vm105, %v803, 0
    %v846 = vsel %vm105, %v804, 0
    %848 = vmatpush.msra.mxu0 0.0
    %849 = vmatpush.msra.mxu0 0.0
    %850 = vmatpush.msra.mxu0 0.0
    %851 = vmatpush.msra.mxu0 0.0
    %852 = vmatpush.msra.mxu0 0.0
    %853 = vmatpush.msra.mxu0 0.0
    %854 = vmatpush.msra.mxu0 0.0
    %855 = vmatpush.msra.mxu0 0.0
    %856 = vmatpush.msra.mxu0 0.0
    %857 = vmatpush.msra.mxu0 0.0
    %858 = vmatpush.msra.mxu0 0.0
    %859 = vmatpush.msra.mxu0 0.0
    %860 = vmatpush.msra.mxu0 %v808
    %861 = vmatpush.msra.mxu0 %v807
    %862 = vmatpush.msra.mxu0 %v806
    %863 = vmatpush.msra.mxu0 %v805
    %864 = vmatmul.f32.gmra.mxu0 %v843
    %v865 = vpop.f32.mrf.mxu0
    %v866 = vadd.f32 %v837, %v865
    %867 = vmatmul.f32.gmra.mxu0 %v846
    %v868 = vpop.f32.mrf.mxu0
    %v869 = vadd.f32 %v840, %v868
    %870 = vdwg.mxu0
    %v871 = vld [vmem:[%s9] sm:$0x1]
    %v873 = vperm.slane %v871, 0
    %v875 = vadd.f32 %v866, %v873
    %v876 = vadd.f32 %v869, %v873
    %vm877 = vcmp.ge.s32.totalorder %v182, 64
    %v878 = vmin.f32 %v875, 20.0
    %v879 = vmin.f32 %v876, 20.0
    %vm880 = vcmp.gt.f32.partialorder %v875, 20.0
    %vm881 = vcmp.gt.f32.partialorder %v876, 20.0
    %v882 = vmul.f32 %v878, 1.442695
    %v883 = vpow.pop %v882
    %v884 = vmul.f32 %v879, 1.442695
    %v885 = vpow.pop %v884
    %v886 = vadd.f32 %v883, 1.0
    %v887 = vlog2.pop %v886
    %v888 = vmul.f32 %v887, 0.6931472
    %v889 = vmul.f32 -0.5, %v883
    %v890 = vadd.f32 %v889, 1.0
    %v891 = vmul.f32 %v890, %v883
    %v892 = vand.u32 2147483647, %v883
    %vm893 = vcmp.lt.f32.partialorder %v892, 0.0004427343
    %v894 = vsel %vm893, %v891, %v888
    %v895 = vadd.f32 %v885, 1.0
    %v896 = vlog2.pop %v895
    %v897 = vmul.f32 %v896, 0.6931472
    %v898 = vmul.f32 -0.5, %v885
    %v899 = vadd.f32 %v898, 1.0
    %v900 = vmul.f32 %v899, %v885
    %v901 = vand.u32 2147483647, %v885
    %vm902 = vcmp.lt.f32.partialorder %v901, 0.0004427343
    %v903 = vsel %vm902, %v900, %v897
    %v904 = vsel %vm880, %v875, %v894
    %v905 = vsel %vm881, %v876, %v903
    %v906 = vsel %vm877, %v904, %v875
    %v907 = vsel %vm877, %v905, %v876
    %908 = vst [vmem:[#allocation8] sm:$0xff] %v906
    %909 = vst [vmem:[#allocation8 + $0x10] sm:$0xff] %v907
    %v910 = vld [vmem:[#allocation7] sm:$0xff]
    %v911 = vld [vmem:[#allocation7 + $0x8] sm:$0xff]
    %914 = vrot.lane.b32.xlu0 %v906, 64
    %v915 = vpop.permute.xlu0 %914
    %916 = vrot.lane.b32.xlu0 %v907, 64
    %v917 = vpop.permute.xlu0 %916
    %v920 = vmul.f32 %v910, %v915
    %v921 = vmul.f32 %v911, %v917
    %v922 = vadd.f32 %v875, %v920
    %v923 = vadd.f32 %v876, %v921
    %vm924 = vcmask 523264
    %925 = vst.msk [vmem:[#allocation8 + $0x8] sm:$0xff] %vm924, %v922
    %926 = vst.msk [vmem:[#allocation8 + $0x18] sm:$0xff] %vm924, %v923
    // Predicated region
    $region54: #{tpu_custom_call.1} parent=1 // pred_check
      _
    $region55: #{tpu_custom_call.1} parent=1 // pred_check_branch
      %928 = sbr.rel (0) target = $region57
    $region56: #{tpu_custom_call.1} parent=1 // pred_region
      %930 = vsyncadd [#allocation4], 0
      %s931 = sshll.u32 [#allocation8], 4
      %s932 = int_to_ptr.vmem [resolvable:$true] %s931
      %s933 = sshll.u32 %s10, 4
      %s934 = int_to_ptr.hbm [resolvable:$true] %s933
      %939 = dma.vmem_to_hbm [thread:$0]  %s932, 512, %s934, [#allocation4], 256, 256, 16
    $region57: #{tpu_custom_call.1} parent=1 // pred_fallthru
      _
    // Predicated region
    $region58: #{tpu_custom_call.1} parent=1 // pred_check
      _
    $region59: #{tpu_custom_call.1} parent=1 // pred_check_branch
      %941 = sbr.rel (0) target = $region61
    $region60: #{tpu_custom_call.1} parent=1 // pred_region
      %943 = dma.done [#allocation4], 512
    $region61: #{tpu_custom_call.1} parent=1 // pred_fallthru
      _
    %944 = vsyncpa [#allocation3], 1
    %945 = vsyncpa [#allocation6], 1
    %946 = vsyncpa [#allocation4], 1

</llo_original>
